<compile_context>
chip_gen: v5e
topology: v5e:2x2
jax: 0.10.0
libtpu: 0.0.40
codegen_flags: <defaults>
</compile_context>

<pallas_src>
import jax
import jax.numpy as jnp
from jax.experimental import pallas as pl
from jax.experimental.pallas import tpu as pltpu

_LANES = 128
_MIN_STEPS = 4                    # target >=4 pipelined grid steps on the kernel path
_FAST_PATH_BYTES = 512 * 1024     # below this per operand, let XLA fuse a plain multiply


def _mul_kernel(a_ref, b_ref, o_ref):
    # Hot path: one VPU elementwise multiply over the whole VMEM tile.
    o_ref[...] = a_ref[...] * b_ref[...]


def _sublane_packing(itemsize: int) -> int:
    """Rows per packed vreg sublane group: f32 -> 8, bf16 -> 16, int8/fp8 -> 32."""
    return max(8, 32 // max(1, itemsize))


def _max_tile_bytes() -> int:
    """Per-generation tile budget (bytes)."""
    try:
        kind = jax.devices()[0].device_kind.lower()
    except Exception:  # pragma: no cover - be robust to odd backends
        kind = ""
    if "7" in kind:
        # v7x: ~3.2 TB/s HBM per TC, so per-step overhead is a larger fraction
        # of wall time -> bigger tiles. 3 arrays x 2 bufs x 4 MiB = 24 MiB,
        # still under the 32 MiB scoped default (64 MiB physical).
        return 4 * 1024 * 1024
    # v5e/v6e: 2 MiB tiles -> 12 MiB of buffers, safe under v5e's 16 MiB default.
    return 2 * 1024 * 1024


def _choose_tile_rows(rows: int, itemsize: int, max_tile_bytes: int) -> int:
    """Row-tile size: packing-aligned, under the VMEM budget, >= _MIN_STEPS steps."""
    pack = _sublane_packing(itemsize)
    budget_rows = max(pack, (max_tile_bytes // (_LANES * itemsize)) // pack * pack)
    # Aim for at least _MIN_STEPS grid steps so the pipeline can overlap DMA.
    per_step = (rows // _MIN_STEPS) // pack * pack
    if per_step >= pack:
        return min(budget_rows, per_step)
    # Very small row counts (only reachable via force_kernel on tiny inputs):
    # a single full-extent block is always layout-legal.
    return min(rows, budget_rows) if rows > budget_rows else rows


def multip(A, B, *, force_kernel: bool = False, donate_a: bool = False):
    """torch.mul(A, B) — elementwise product (same shape, no broadcasting)."""
    assert A.shape == B.shape and A.dtype == B.dtype, (
        "broadcasting / dtype promotion not supported by this kernel")
    orig_shape = A.shape
    n = A.size
    itemsize = A.dtype.itemsize
    nbytes = n * itemsize

    # Tiny inputs: a standalone custom call is pure launch overhead — let XLA
    # fuse the multiply into surrounding ops instead.
    if (nbytes < _FAST_PATH_BYTES and not force_kernel) or n % _LANES != 0:
        # TODO(synk): pad/mask inside the kernel to support sizes that are not a
        # multiple of 128 lanes instead of falling back to XLA for them.
        return A * B

    # Present a lane-dense (rows, 128) slab so the last dim maps to the 128-lane axis.
    rows = n // _LANES
    a2 = A.reshape(rows, _LANES)
    b2 = B.reshape(rows, _LANES)

    tile_rows = _choose_tile_rows(rows, itemsize, _max_tile_bytes())
    num_steps = int(pl.cdiv(rows, tile_rows))  # ragged last block handled by Pallas

    tile_bytes = tile_rows * _LANES * itemsize
    # 3 arrays (A, B, out) x 2-deep double-buffering + headroom for internal scratch.
    vmem_limit = int(max(3 * 2 * tile_bytes + 4 * 1024 * 1024, 16 * 1024 * 1024))

    # Shard across TensorCores (v7x) whenever there is more than one block;
    # on v5e/v6e (1 TC) "parallel" is harmless.
    semantics = ("parallel",) if num_steps > 1 else ("arbitrary",)

    out2 = pl.pallas_call(
        _mul_kernel,
        out_shape=jax.ShapeDtypeStruct((rows, _LANES), A.dtype),
        grid=(num_steps,),
        in_specs=[
            pl.BlockSpec((tile_rows, _LANES), lambda i: (i, 0)),
            pl.BlockSpec((tile_rows, _LANES), lambda i: (i, 0)),
        ],
        out_specs=pl.BlockSpec((tile_rows, _LANES), lambda i: (i, 0)),
        compiler_params=pltpu.CompilerParams(
            dimension_semantics=semantics,
            vmem_limit_bytes=vmem_limit,
        ),
        cost_estimate=pl.CostEstimate(
            flops=n, transcendentals=0, bytes_accessed=3 * nbytes),
        input_output_aliases=({0: 0} if donate_a else {}),
    )(a2, b2)

    return out2.reshape(orig_shape)


if __name__ == "__main__":
    key = jax.random.PRNGKey(0)
    k1, k2, k3, k4 = jax.random.split(key, 4)

    # 1) Module-shaped small inputs (NCHW: batch=2, channels=4, spatial=16x16).
    #    8 KiB/operand -> fast path (fused XLA multiply, no kernel launch).
    A = jax.random.normal(k1, (2, 4, 16, 16), dtype=jnp.float32)
    B = jax.random.normal(k2, (2, 4, 16, 16), dtype=jnp.float32)
    out_small = multip(A, B)
    jax.block_until_ready(out_small)
    ref_small = A * B
    assert out_small.shape == ref_small.shape
    assert jnp.allclose(out_small, ref_small, atol=1e-6, rtol=1e-6)

    # 2) Same small shape forced through the Pallas kernel (compile/run check).
    out_forced = multip(A, B, force_kernel=True)
    jax.block_until_ready(out_forced)
    assert jnp.allclose(out_forced, ref_small, atol=1e-6, rtol=1e-6)

    # 3) Mid-size input above the fast-path threshold whose row count has no
    #    clean divisor -> exercises the cdiv grid, multi-step pipelining and
    #    the ragged last block.
    A2 = jax.random.normal(k3, (520, 384), dtype=jnp.float32)  # ~780 KiB/operand
    B2 = jax.random.normal(k4, (520, 384), dtype=jnp.float32)
    out_mid = multip(A2, B2)
    jax.block_until_ready(out_mid)
    assert jnp.allclose(out_mid, A2 * B2, atol=1e-6, rtol=1e-6)

    print("KERNEL_OK")
</pallas_src>

<mosaic_0001>
module attributes {stable_mosaic.version = 11 : i64} {
  func.func @_mul_kernel(%arg0: i32, %arg1: memref<16x128xf32, #tpu.memory_space<vmem>>, %arg2: memref<16x128xf32, #tpu.memory_space<vmem>>, %arg3: memref<16x128xf32, #tpu.memory_space<vmem>>) attributes {dimension_semantics = [#tpu.dimension_semantics<arbitrary>], iteration_bounds = array<i64: 1>, scalar_prefetch = 0 : i64, scratch_operands = 0 : i64, tpu.core_type = #tpu.core_type<tc>, window_params = [{transform_indices = @transform_0, window_bounds = array<i64: 16, 128>}, {transform_indices = @transform_1, window_bounds = array<i64: 16, 128>}, {transform_indices = @transform_2, window_bounds = array<i64: 16, 128>}]} {
    %c0 = arith.constant 0 : index
    %c0_0 = arith.constant 0 : index
    %0 = vector.load %arg1[%c0, %c0_0] : memref<16x128xf32, #tpu.memory_space<vmem>>, vector<16x128xf32>
    %c0_1 = arith.constant 0 : index
    %c0_2 = arith.constant 0 : index
    %1 = vector.load %arg2[%c0_1, %c0_2] : memref<16x128xf32, #tpu.memory_space<vmem>>, vector<16x128xf32>
    %2 = arith.mulf %0, %1 : vector<16x128xf32>
    %c0_3 = arith.constant 0 : index
    %c0_4 = arith.constant 0 : index
    %3 = vector.load %arg3[%c0_3, %c0_4] : memref<16x128xf32, #tpu.memory_space<vmem>>, vector<16x128xf32>
    tpu.vector_store %arg3[%c0_3, %c0_4], %2 {strides = array<i32>} : memref<16x128xf32, #tpu.memory_space<vmem>>, vector<16x128xf32>,
    return
  }
  func.func @transform_0(%arg0: i32) -> (i32, i32) {
    %c0_i32 = arith.constant 0 : i32
    %c0_i32_0 = arith.constant 0 : i32
    return %arg0, %c0_i32 : i32, i32
  }
  func.func @transform_1(%arg0: i32) -> (i32, i32) {
    %c0_i32 = arith.constant 0 : i32
    %c0_i32_0 = arith.constant 0 : i32
    return %arg0, %c0_i32 : i32, i32
  }
  func.func @transform_2(%arg0: i32) -> (i32, i32) {
    %c0_i32 = arith.constant 0 : i32
    %c0_i32_0 = arith.constant 0 : i32
    return %arg0, %c0_i32 : i32, i32
  }
}

</mosaic_0001>

<llo_original>
// kernel: tpu_custom_call.1
$region0: #{tpu_custom_call.1}
  #allocation0 [shape = 'u32[]', space=smem, size = 0x4, offset = 0x4, fixed_abs, tag = 'smem constant byte address 0x4 - core index']
  #allocation1 [shape = 'u32[72,128]{1,0:T(1,128)}', space=vmem, size = 0x9000, scoped, tag = 'internal scratch']
  %s0 = inlined_call_operand.hbm [shape: f32[16,128], index: 0, kind: input, shape index: {}]
  %s1 = inlined_call_operand.hbm [shape: f32[16,128], index: 1, kind: input, shape index: {}]
  %s2 = inlined_call_operand.hbm [shape: f32[16,128], index: 2, kind: output, shape index: {}]
  %s3 = sld [smem:[#allocation0]]
  $region26: #{tpu_custom_call.1} parent=0
    _
  %s5 = ssub.s32 1, %s3
  %s6 = scalar_select 0, %s5, %s3
  $region1: #{tpu_custom_call.1} parent=0
    #allocation2 [shape = 'u8[8192]{0}', space=vmem, size = 0x2000, scoped, tag = 'input window, operand 0, single buffered']
    #allocation3 [shape = 's32[1]{0}', space=sflag, size = 0x4, scoped, tag = 'scoped memory for tpu_custom_call.1']
    #allocation4 [shape = 's32[1]{0}', space=sflag, size = 0x4, scoped, tag = 'scoped memory for tpu_custom_call.1']
    #allocation5 [shape = 'u8[8192]{0}', space=vmem, size = 0x2000, scoped, tag = 'input window, operand 1, single buffered']
    #allocation6 [shape = 's32[1]{0}', space=sflag, size = 0x4, scoped, tag = 'scoped memory for tpu_custom_call.1']
    #allocation7 [shape = 'u8[8192]{0}', space=vmem, size = 0x2000, scoped, tag = 'output window, operand 0, single buffered']
    %7 = vsyncpa [#allocation3], 0
    %8 = vsyncpa [#allocation6], 0
    %9 = vsyncpa [#allocation4], 0
    // Predicated region
    $region2: #{tpu_custom_call.1} parent=1 // pred_check
      _
    $region3: #{tpu_custom_call.1} parent=1 // pred_check_branch
      %11 = sbr.rel (0) target = $region5
    $region4: #{tpu_custom_call.1} parent=1 // pred_region
      %13 = vsyncadd [#allocation3], 0
      %s14 = sshll.u32 %s0, 4
      %s15 = int_to_ptr.hbm [resolvable:$true] %s14
      %s16 = sshll.u32 [#allocation2], 4
      %s17 = int_to_ptr.vmem [resolvable:$true] %s16
      %22 = dma.hbm_to_vmem [thread:$0]  %s15, 256, %s17, [#allocation3], 128, 128, 8
    $region5: #{tpu_custom_call.1} parent=1 // pred_fallthru
      _
    // Predicated region
    $region6: #{tpu_custom_call.1} parent=1 // pred_check
      _
    $region7: #{tpu_custom_call.1} parent=1 // pred_check_branch
      %24 = sbr.rel (0) target = $region9
    $region8: #{tpu_custom_call.1} parent=1 // pred_region
      %26 = vsyncadd [#allocation6], 0
      %s27 = sshll.u32 %s1, 4
      %s28 = int_to_ptr.hbm [resolvable:$true] %s27
      %s29 = sshll.u32 [#allocation5], 4
      %s30 = int_to_ptr.vmem [resolvable:$true] %s29
      %35 = dma.hbm_to_vmem [thread:$0]  %s28, 256, %s30, [#allocation6], 128, 128, 8
    $region9: #{tpu_custom_call.1} parent=1 // pred_fallthru
      _
    // Predicated region
    $region10: #{tpu_custom_call.1} parent=1 // pred_check
      _
    $region11: #{tpu_custom_call.1} parent=1 // pred_check_branch
      %37 = sbr.rel (0) target = $region13
    $region12: #{tpu_custom_call.1} parent=1 // pred_region
      %39 = dma.done [#allocation3], 256
    $region13: #{tpu_custom_call.1} parent=1 // pred_fallthru
      _
    // Predicated region
    $region14: #{tpu_custom_call.1} parent=1 // pred_check
      _
    $region15: #{tpu_custom_call.1} parent=1 // pred_check_branch
      %41 = sbr.rel (0) target = $region17
    $region16: #{tpu_custom_call.1} parent=1 // pred_region
      %43 = dma.done [#allocation6], 256
    $region17: #{tpu_custom_call.1} parent=1 // pred_fallthru
      _
    %v44 = vld [vmem:[#allocation2] sm:$0xff]
    %v45 = vld [vmem:[#allocation2 + $0x8] sm:$0xff]
    %v46 = vld [vmem:[#allocation5] sm:$0xff]
    %v47 = vld [vmem:[#allocation5 + $0x8] sm:$0xff]
    %v48 = vmul.f32 %v44, %v46
    %v49 = vmul.f32 %v45, %v47
    %50 = vst [vmem:[#allocation7] sm:$0xff] %v48
    %51 = vst [vmem:[#allocation7 + $0x8] sm:$0xff] %v49
    // Predicated region
    $region18: #{tpu_custom_call.1} parent=1 // pred_check
      _
    $region19: #{tpu_custom_call.1} parent=1 // pred_check_branch
      %53 = sbr.rel (0) target = $region21
    $region20: #{tpu_custom_call.1} parent=1 // pred_region
      %55 = vsyncadd [#allocation4], 0
      %s56 = sshll.u32 [#allocation7], 4
      %s57 = int_to_ptr.vmem [resolvable:$true] %s56
      %s58 = sshll.u32 %s2, 4
      %s59 = int_to_ptr.hbm [resolvable:$true] %s58
      %64 = dma.vmem_to_hbm [thread:$0]  %s57, 256, %s59, [#allocation4], 128, 128, 8
    $region21: #{tpu_custom_call.1} parent=1 // pred_fallthru
      _
    // Predicated region
    $region22: #{tpu_custom_call.1} parent=1 // pred_check
      _
    $region23: #{tpu_custom_call.1} parent=1 // pred_check_branch
      %66 = sbr.rel (0) target = $region25
    $region24: #{tpu_custom_call.1} parent=1 // pred_region
      %68 = dma.done [#allocation4], 256
    $region25: #{tpu_custom_call.1} parent=1 // pred_fallthru
      _
    %69 = vsyncpa [#allocation3], 1
    %70 = vsyncpa [#allocation6], 1
    %71 = vsyncpa [#allocation4], 1

</llo_original>
